<compile_context>
chip_gen: v6e
topology: v6e:2x2x1
jax: 0.10.0
libtpu: 0.0.40
codegen_flags: <defaults>
</compile_context>

<pallas_src>
import jax
import jax.numpy as jnp
from jax.experimental import pallas as pl
from jax.experimental.pallas import tpu as pltpu

IN_CHANNELS = 513  # 1 (bias) + 512 (weight) per BasePolicyNetwork.from_config


def _policy_kernel(q_ref,                      # scalar-prefetch: unique query row ids (SMEM)
                   wrow_ref, brow_ref, prow_ref,  # gathered rows: (1,1,512), (1,1,1), (1,1,C)
                   wmat_ref, wbrow_ref,           # resident: W_value[1:] (512,C) bf16, W_value[0] (1,C) f32
                   newc_ref, sq_ref):             # outputs: (1,1,C) softmax row, (1,) SMEM scalar
    i = pl.program_id(0)

    # 1x1 "AttentionConv" == value projection. K=512 contraction on the MXU
    # (bf16 operands, f32 accumulate); the bias column is a rank-1 VPU term.
    w_row = wrow_ref[0].astype(jnp.bfloat16)                       # (1, 512) bf16
    concen = jnp.dot(w_row, wmat_ref[...],
                     preferred_element_type=jnp.float32)           # (1, C) f32
    concen = concen + brow_ref[0] * wbrow_ref[...]                 # (1,1)*(1,C) broadcast

    # softmax(concen + prior, dim=1), all f32.
    logits = concen + prow_ref[0]
    m = jnp.max(logits, axis=-1, keepdims=True)
    e = jnp.exp(logits - m)
    newc_ref[0] = e / jnp.sum(e, axis=-1, keepdims=True)

    # Regularizer numerator: accumulate sum(concen**2) across rows into SMEM.
    partial = jnp.sum(concen * concen)

    @pl.when(i == 0)
    def _():
        sq_ref[0] = partial

    @pl.when(i > 0)
    def _():
        sq_ref[0] = sq_ref[0] + partial


def policy_core(query_unique, weight, bias, prior, w_value):
    """Pallas hot path with fused row gather.

    For each unique query row q:
        concen[q]     = weight[q] @ W_value[1:] + bias[q] * W_value[0]
        new_concen[q] = softmax(concen[q] + prior[q])
    plus sum(concen**2) accumulated across rows (SMEM scalar output).
    """
    U = int(query_unique.shape[0])
    N, K = weight.shape                      # K = 512
    C = w_value.shape[1]

    # Split the conv weight: bias column stays f32 (VPU), matmul part goes bf16 (MXU).
    w_mat = w_value[1:, :].astype(jnp.bfloat16)      # (512, C)
    w_brow = w_value[0:1, :].astype(jnp.float32)     # (1, C)

    # Reshape so the gathered axis is a leading (non-tiled) dim: blocks are
    # (1, 1, lane-dim) with the last two dims equal to the full array dims.
    weight3 = weight.astype(jnp.float32).reshape(N, 1, K)   # rows stay f32 in HBM;
    bias3 = bias.astype(jnp.float32).reshape(N, 1, 1)       # cast to bf16 in-kernel so we
    prior3 = prior.astype(jnp.float32).reshape(N, 1, C)     # never materialize a full bf16 copy.
    qids = query_unique.astype(jnp.int32)

    grid_spec = pltpu.PrefetchScalarGridSpec(
        num_scalar_prefetch=1,
        grid=(U,),
        in_specs=[
            pl.BlockSpec((1, 1, K), lambda i, q: (q[i], 0, 0)),   # weight row gather
            pl.BlockSpec((1, 1, 1), lambda i, q: (q[i], 0, 0)),   # bias row gather
            pl.BlockSpec((1, 1, C), lambda i, q: (q[i], 0, 0)),   # prior row gather
            pl.BlockSpec((K, C),    lambda i, q: (0, 0)),         # W_value[1:] resident
            pl.BlockSpec((1, C),    lambda i, q: (0, 0)),         # W_value[0]  resident
        ],
        out_specs=(
            pl.BlockSpec((1, 1, C), lambda i, q: (i, 0, 0)),      # new_concen row
            pl.BlockSpec(memory_space=pltpu.SMEM),                # scalar sum of squares
        ),
    )

    newc3, sq = pl.pallas_call(
        _policy_kernel,
        out_shape=(
            jax.ShapeDtypeStruct((U, 1, C), jnp.float32),
            jax.ShapeDtypeStruct((1,), jnp.float32),
        ),
        grid_spec=grid_spec,
        # "arbitrary": the SMEM scalar accumulates sequentially across rows.
        compiler_params=pltpu.CompilerParams(
            dimension_semantics=("arbitrary",)),
    )(qids, weight3, bias3, prior3, w_mat, w_brow)

    return newc3.reshape(U, C), sq[0]


def base_policy_forward(params, state, prior, query, sample_key, concen_decay):
    bias = state["bias"].reshape(-1).astype(jnp.float32)            # (N,)
    weight = state["weight"].reshape(-1, 512).astype(jnp.float32)   # (N, 512)

    query_unique = jnp.unique(query)                                # sorted unique (eager)
    U = int(query_unique.shape[0])

    new_concen, sumsq = policy_core(
        query_unique, weight, bias, prior.astype(jnp.float32), params["w_value"])

    C = new_concen.shape[1]
    reg = (sumsq / (U * C)) * concen_decay                          # (concen**2).mean() * decay

    # Dirichlet rsample per unique query (torch Dirichlet.rsample equivalent).
    samples = jax.random.dirichlet(sample_key, new_concen)          # (U, C)

    # itemgetter(*query)(dict keyed by unique ids) == gather by position in unique.
    pos = jnp.searchsorted(query_unique, query)
    new_hierarchy = samples[pos]                                    # (len(query), C)
    return new_hierarchy, reg


if __name__ == "__main__":
    key = jax.random.PRNGKey(0)
    k_w, k_b, k_wt, k_prior, k_q, k_samp = jax.random.split(key, 6)

    N = 16            # number of classifier rows (state['weight'] has N x 512)
    C = 32            # out_channels (prior['family|species'].shape[1])
    Q = 8             # query length
    concen_decay = 1e-4

    # Deterministic "AttentionConv" value-projection weight: (513, C), no bias.
    w_value = (jax.random.normal(k_w, (IN_CHANNELS, C), jnp.float32)
               * (1.0 / jnp.sqrt(IN_CHANNELS)))
    params = {"w_value": w_value}

    state = {
        "bias": jax.random.normal(k_b, (N,), jnp.float32),
        "weight": jax.random.normal(k_wt, (N, 512), jnp.float32),
    }
    prior = jax.random.normal(k_prior, (N, C), jnp.float32)
    query = jax.random.randint(k_q, (Q,), 0, N)

    new_hierarchy, reg = base_policy_forward(
        params, state, prior, query, k_samp, concen_decay)
    jax.block_until_ready((new_hierarchy, reg))

    assert new_hierarchy.shape == (Q, C)
    assert jnp.all(jnp.isfinite(new_hierarchy))
    assert jnp.isfinite(reg)
    # each Dirichlet sample row sums to 1
    assert jnp.allclose(jnp.sum(new_hierarchy, axis=1), 1.0, atol=1e-4)

    print("KERNEL_OK")
</pallas_src>

<mosaic_0001>
module attributes {stable_mosaic.version = 11 : i64} {
  func.func @_policy_kernel(%arg0: i32, %arg1: memref<8xi32, #tpu.memory_space<smem>>, %arg2: memref<1x1x512xf32, #tpu.memory_space<vmem>>, %arg3: memref<1x1x1xf32, #tpu.memory_space<vmem>>, %arg4: memref<1x1x32xf32, #tpu.memory_space<vmem>>, %arg5: memref<512x32xbf16, #tpu.memory_space<vmem>>, %arg6: memref<1x32xf32, #tpu.memory_space<vmem>>, %arg7: memref<1x1x32xf32, #tpu.memory_space<vmem>>, %arg8: memref<1xf32, #tpu.memory_space<smem>>) attributes {dimension_semantics = [#tpu.dimension_semantics<arbitrary>], iteration_bounds = array<i64: 8>, scalar_prefetch = 1 : i64, scratch_operands = 0 : i64, tpu.core_type = #tpu.core_type<tc>, window_params = [{transform_indices = @transform_0, window_bounds = array<i64: 1, 1, 512>}, {transform_indices = @transform_1, window_bounds = array<i64: 1, 1, 1>}, {transform_indices = @transform_2, window_bounds = array<i64: 1, 1, 32>}, {pipeline_mode = #tpu.pipeline_mode<synchronous>, transform_indices = @transform_3, window_bounds = array<i64: 512, 32>}, {pipeline_mode = #tpu.pipeline_mode<synchronous>, transform_indices = @transform_4, window_bounds = array<i64: 1, 32>}, {transform_indices = @transform_5, window_bounds = array<i64: 1, 1, 32>}, {transform_indices = @transform_6, window_bounds = array<i64: 1>}]} {
    %c0 = arith.constant 0 : index
    %c0_0 = arith.constant 0 : index
    %c0_1 = arith.constant 0 : index
    %0 = vector.load %arg2[%c0, %c0_0, %c0_1] : memref<1x1x512xf32, #tpu.memory_space<vmem>>, vector<1x1x512xf32>
    %1 = vector.shape_cast %0 : vector<1x1x512xf32> to vector<1x512xf32>
    %2 = arith.truncf %1 : vector<1x512xf32> to vector<1x512xbf16>
    %c0_2 = arith.constant 0 : index
    %c0_3 = arith.constant 0 : index
    %3 = vector.load %arg5[%c0_2, %c0_3] : memref<512x32xbf16, #tpu.memory_space<vmem>>, vector<512x32xbf16>
    %cst = arith.constant dense<0.000000e+00> : vector<1x32xf32>
    %4 = tpu.matmul %2, %3, %cst {dimension_numbers = #tpu.dot_dimension_numbers<[1], [0], [0], [1], [0, 0, 1, 1], [], []>} : vector<1x512xbf16>, vector<512x32xbf16>, vector<1x32xf32> -> vector<1x32xf32>
    %c0_4 = arith.constant 0 : index
    %c0_5 = arith.constant 0 : index
    %c0_6 = arith.constant 0 : index
    %5 = vector.load %arg3[%c0_4, %c0_5, %c0_6] : memref<1x1x1xf32, #tpu.memory_space<vmem>>, vector<1x1x1xf32>
    %6 = vector.shape_cast %5 : vector<1x1x1xf32> to vector<1x1xf32>
    %c0_7 = arith.constant 0 : index
    %c0_8 = arith.constant 0 : index
    %7 = vector.load %arg6[%c0_7, %c0_8] : memref<1x32xf32, #tpu.memory_space<vmem>>, vector<1x32xf32>
    %8 = vector.broadcast %6 : vector<1x1xf32> to vector<1x32xf32>
    %9 = arith.mulf %8, %7 : vector<1x32xf32>
    %10 = arith.addf %4, %9 : vector<1x32xf32>
    %c0_9 = arith.constant 0 : index
    %c0_10 = arith.constant 0 : index
    %c0_11 = arith.constant 0 : index
    %11 = vector.load %arg4[%c0_9, %c0_10, %c0_11] : memref<1x1x32xf32, #tpu.memory_space<vmem>>, vector<1x1x32xf32>
    %12 = vector.shape_cast %11 : vector<1x1x32xf32> to vector<1x32xf32>
    %13 = arith.addf %10, %12 : vector<1x32xf32>
    %cst_12 = arith.constant dense<0xFF800000> : vector<1xf32>
    %14 = vector.multi_reduction <maximumf>, %13, %cst_12 [1] : vector<1x32xf32> to vector<1xf32>
    %15 = vector.shape_cast %14 : vector<1xf32> to vector<1x1xf32>
    %16 = vector.broadcast %15 : vector<1x1xf32> to vector<1x32xf32>
    %17 = arith.subf %13, %16 : vector<1x32xf32>
    %18 = math.exp %17 : vector<1x32xf32>
    %cst_13 = arith.constant dense<0.000000e+00> : vector<1xf32>
    %19 = vector.multi_reduction <add>, %18, %cst_13 [1] : vector<1x32xf32> to vector<1xf32>
    %20 = vector.shape_cast %19 : vector<1xf32> to vector<1x1xf32>
    %21 = vector.broadcast %20 : vector<1x1xf32> to vector<1x32xf32>
    %22 = arith.divf %18, %21 : vector<1x32xf32>
    %c0_14 = arith.constant 0 : index
    %c0_15 = arith.constant 0 : index
    %c0_16 = arith.constant 0 : index
    %23 = vector.load %arg7[%c0_14, %c0_15, %c0_16] : memref<1x1x32xf32, #tpu.memory_space<vmem>>, vector<1x1x32xf32>
    %24 = vector.shape_cast %23 : vector<1x1x32xf32> to vector<1x32xf32>
    %25 = vector.shape_cast %22 : vector<1x32xf32> to vector<1x1x32xf32>
    tpu.vector_store %arg7[%c0_14, %c0_15, %c0_16], %25 {strides = array<i32>} : memref<1x1x32xf32, #tpu.memory_space<vmem>>, vector<1x1x32xf32>,
    %26 = arith.mulf %10, %10 : vector<1x32xf32>
    %27 = vector.shape_cast %26 : vector<1x32xf32> to vector<1x1x32xf32>
    %cst_17 = arith.constant dense<0.000000e+00> : vector<1xf32>
    %28 = vector.multi_reduction <add>, %27, %cst_17 [1, 2] : vector<1x1x32xf32> to vector<1xf32>
    %29 = vector.shape_cast %28 : vector<1xf32> to vector<1x1x1xf32>
    %30 = vector.extract %29[0, 0, 0] : f32 from vector<1x1x1xf32>
    %c0_i32 = arith.constant 0 : i32
    %31 = arith.cmpi eq, %arg0, %c0_i32 : i32
    %32 = arith.extui %31 : i1 to i32
    %c0_i32_18 = arith.constant 0 : i32
    %33 = arith.cmpi ne, %32, %c0_i32_18 : i32
    scf.if %33 {
      %c0_21 = arith.constant 0 : index
      %37 = memref.load %arg8[%c0_21] : memref<1xf32, #tpu.memory_space<smem>>
      memref.store %30, %arg8[%c0_21] : memref<1xf32, #tpu.memory_space<smem>>
    } else {
    }
    %c0_i32_19 = arith.constant 0 : i32
    %34 = arith.cmpi sgt, %arg0, %c0_i32_19 : i32
    %35 = arith.extui %34 : i1 to i32
    %c0_i32_20 = arith.constant 0 : i32
    %36 = arith.cmpi ne, %35, %c0_i32_20 : i32
    scf.if %36 {
      %c0_21 = arith.constant 0 : index
      %37 = memref.load %arg8[%c0_21] : memref<1xf32, #tpu.memory_space<smem>>
      %38 = arith.addf %37, %30 : f32
      %c0_22 = arith.constant 0 : index
      %39 = memref.load %arg8[%c0_22] : memref<1xf32, #tpu.memory_space<smem>>
      memref.store %38, %arg8[%c0_22] : memref<1xf32, #tpu.memory_space<smem>>
    } else {
    }
    return
  }
  func.func @transform_0(%arg0: i32, %arg1: memref<8xi32, #tpu.memory_space<smem>>) -> (i32, i32, i32) {
    %0 = arith.index_cast %arg0 : i32 to index
    %1 = memref.load %arg1[%0] : memref<8xi32, #tpu.memory_space<smem>>
    %c0_i32 = arith.constant 0 : i32
    %c0_i32_0 = arith.constant 0 : i32
    %c0_i32_1 = arith.constant 0 : i32
    return %1, %c0_i32, %c0_i32_0 : i32, i32, i32
  }
  func.func @transform_1(%arg0: i32, %arg1: memref<8xi32, #tpu.memory_space<smem>>) -> (i32, i32, i32) {
    %0 = arith.index_cast %arg0 : i32 to index
    %1 = memref.load %arg1[%0] : memref<8xi32, #tpu.memory_space<smem>>
    %c0_i32 = arith.constant 0 : i32
    %c0_i32_0 = arith.constant 0 : i32
    %c0_i32_1 = arith.constant 0 : i32
    return %1, %c0_i32, %c0_i32_0 : i32, i32, i32
  }
  func.func @transform_2(%arg0: i32, %arg1: memref<8xi32, #tpu.memory_space<smem>>) -> (i32, i32, i32) {
    %0 = arith.index_cast %arg0 : i32 to index
    %1 = memref.load %arg1[%0] : memref<8xi32, #tpu.memory_space<smem>>
    %c0_i32 = arith.constant 0 : i32
    %c0_i32_0 = arith.constant 0 : i32
    %c0_i32_1 = arith.constant 0 : i32
    return %1, %c0_i32, %c0_i32_0 : i32, i32, i32
  }
  func.func @transform_3(%arg0: i32, %arg1: memref<8xi32, #tpu.memory_space<smem>>) -> (i32, i32) {
    %c0_i32 = arith.constant 0 : i32
    %c0_i32_0 = arith.constant 0 : i32
    %c0_i32_1 = arith.constant 0 : i32
    return %c0_i32, %c0_i32_0 : i32, i32
  }
  func.func @transform_4(%arg0: i32, %arg1: memref<8xi32, #tpu.memory_space<smem>>) -> (i32, i32) {
    %c0_i32 = arith.constant 0 : i32
    %c0_i32_0 = arith.constant 0 : i32
    %c0_i32_1 = arith.constant 0 : i32
    return %c0_i32, %c0_i32_0 : i32, i32
  }
  func.func @transform_5(%arg0: i32, %arg1: memref<8xi32, #tpu.memory_space<smem>>) -> (i32, i32, i32) {
    %c0_i32 = arith.constant 0 : i32
    %c0_i32_0 = arith.constant 0 : i32
    %c0_i32_1 = arith.constant 0 : i32
    return %arg0, %c0_i32, %c0_i32_0 : i32, i32, i32
  }
  func.func @transform_6(%arg0: i32, %arg1: memref<8xi32, #tpu.memory_space<smem>>) -> i32 {
    %c0_i32 = arith.constant 0 : i32
    %c0_i32_0 = arith.constant 0 : i32
    return %c0_i32 : i32
  }
}

</mosaic_0001>

<llo_original>
// kernel: tpu_custom_call.1
$region0: #{tpu_custom_call.1}
  #allocation0 [shape = 'u32[]', space=smem, size = 0x4, offset = 0x4, fixed_abs, tag = 'smem constant byte address 0x4 - core index']
  #allocation1 [shape = 'u32[144,128]{1,0:T(1,128)}', space=vmem, size = 0x12000, scoped, tag = 'internal scratch']
  #allocation2 [shape = 's32[1]{0}', space=sflag, size = 0x4, scoped, tag = 'scoped memory for tpu_custom_call.1']
  #allocation3 [shape = 'u8[512]{0}', space=smem, size = 0x200, scoped, tag = 'prefetched SMEM operand 0']
  %s0 = inlined_call_operand.vmem [shape: s32[8], index: 0, kind: input, shape index: {}]
  %s1 = inlined_call_operand.vmem [shape: f32[16,1,512], index: 1, kind: input, shape index: {}]
  %s2 = inlined_call_operand.vmem [shape: f32[16,1,1], index: 2, kind: input, shape index: {}]
  %s3 = inlined_call_operand.vmem [shape: f32[16,1,32], index: 3, kind: input, shape index: {}]
  %s4 = inlined_call_operand.vmem [shape: bf16[512,32], index: 4, kind: input, shape index: {}]
  %s5 = inlined_call_operand.vmem [shape: f32[1,32], index: 5, kind: input, shape index: {}]
  %s6 = inlined_call_operand.hbm [shape: f32[8,1,32], index: 6, kind: output, shape index: {0}]
  %s7 = inlined_call_operand.hbm [shape: f32[1], index: 7, kind: output, shape index: {1}]
  %8 = xla_tuple %s6, %s7
  %s9 = sld [smem:[#allocation0]]
  $region69: #{tpu_custom_call.1} parent=0
    _
  %s11 = ssub.s32 1, %s9
  %s12 = scalar_select 0, %s11, %s9
  %s13 = sshll.u32 %s0, 4
  %s14 = int_to_ptr.vmem [resolvable:$true] %s13
  %16 = dma.vmem_to_smem %s14, 16, [#allocation3], [#allocation2]
  %17 = dma.done [#allocation2], 16
  %18 = sfence
  $region1: #{tpu_custom_call.1} parent=0
    #allocation4 [shape = 'u8[1024]{0}', space=vmem, size = 0x400, scoped, tag = 'output window, operand 0']
    #allocation5 [shape = 's32[2]{0}', space=sflag, size = 0x8, scoped, tag = 'scoped memory for tpu_custom_call.1']
    #allocation6 [shape = 's32[2]{0}', space=sflag, size = 0x8, scoped, tag = 'scoped memory for tpu_custom_call.1']
    #allocation7 [shape = 'u8[512]{0}', space=smem, size = 0x200, scoped, tag = 'output window, operand 1, single buffered']
    %19 = vsyncpa [#allocation5], 0
    %s20 = scalar_lea.sflag [#allocation5], 1
    %21 = vsyncpa %s20, 0
    %22 = vsyncpa [#allocation6], 0
    loop: start=0, step=1, limit=10
    $region2: #{tpu_custom_call.1} parent=1 // loop_pre_header
      _
    $region3: #{tpu_custom_call.1} parent=1 // loop_header
      %s24 = sphi 0, %s28
      %p25 = scmp.ge.s32.totalorder %s24, 10
      %s36 = sphi 0, %s38
      %s39 = sphi 0, %s36
      %s40 = sphi 0, %s39
      %s56 = sphi 0, %s40
      %s64 = sphi 0, %s66
      %s67 = sphi 0, %s64
      %s68 = sphi 0, %s67
      %s84 = sphi 0, %s68
      %s92 = sphi 0, %s94
      %s95 = sphi 0, %s92
      %s96 = sphi 0, %s95
      %s112 = sphi 0, %s96
      %s116 = sphi 0, %s116
      %s118 = sphi 0, %s116
      %s119 = sphi 0, %s118
      %s133 = sphi 0, %s119
      %s137 = sphi 0, %s137
      %s139 = sphi 0, %s137
      %s140 = sphi 0, %s139
      %s154 = sphi 0, %s140
      %s160 = sphi 0, %s162
      %s163 = sphi 0, %s160
      %s164 = sphi 0, %s163
      %s180 = sphi 0, %s164
      %s184 = sphi 0, %s184
      %s186 = sphi 0, %s184
      %s187 = sphi 0, %s186
      %s201 = sphi 0, %s187
    $region4: #{tpu_custom_call.1} parent=1 // loop_header_branch
      %27 = sbr.rel (%p25) target = $region8
    $region5: #{tpu_custom_call.1} parent=1 // loop_body
      %s29 = ssub.s32 %s24, 1
      %s30 = ssub.s32 %s24, 2
      %s31 = sadd.s32 %s24, 1
      %s32 = sld [smem:[#allocation3 + %s24]]
      %s33 = sld [smem:[#allocation3 + %s31]]
      %s34 = ssub.s32 %s32, %s33
      %p35 = scmp.eq.s32.totalorder %s34, 0
      %s37 = sadd.s32 %s36, 1
      %s38 = scalar_select %p35, %s36, %s37
      %p41 = pneg %p35
      %p42 = scmp.eq.s32.totalorder %s24, 7
      %p43 = por %p41, %p42
      %p44 = scmp.ne.s32.totalorder %s36, %s39
      %p45 = scmp.eq.s32.totalorder %s24, 0
      %p46 = por %p44, %p45
      %p47 = scmp.ne.s32.totalorder %s36, %s39
      %p48 = scmp.eq.s32.totalorder %s29, 7
      %p49 = por %p47, %p48
      %p50 = scmp.ne.s32.totalorder %s39, %s40
      %p51 = scmp.eq.s32.totalorder %s29, 0
      %p52 = por %p50, %p51
      %p53 = scmp.ne.s32.totalorder %s39, %s40
      %p54 = scmp.eq.s32.totalorder %s30, 7
      %p55 = por %p53, %p54
      %p57 = scmp.ne.s32.totalorder %s40, %s56
      %p58 = scmp.eq.s32.totalorder %s30, 0
      %p59 = por %p57, %p58
      %s60 = sld [smem:[#allocation3 + %s24]]
      %s61 = sld [smem:[#allocation3 + %s31]]
      %s62 = ssub.s32 %s60, %s61
      %p63 = scmp.eq.s32.totalorder %s62, 0
      %s65 = sadd.s32 %s64, 1
      %s66 = scalar_select %p63, %s64, %s65
      %p69 = pneg %p63
      %p70 = scmp.eq.s32.totalorder %s24, 7
      %p71 = por %p69, %p70
      %p72 = scmp.ne.s32.totalorder %s64, %s67
      %p73 = scmp.eq.s32.totalorder %s24, 0
      %p74 = por %p72, %p73
      %p75 = scmp.ne.s32.totalorder %s64, %s67
      %p76 = scmp.eq.s32.totalorder %s29, 7
      %p77 = por %p75, %p76
      %p78 = scmp.ne.s32.totalorder %s67, %s68
      %p79 = scmp.eq.s32.totalorder %s29, 0
      %p80 = por %p78, %p79
      %p81 = scmp.ne.s32.totalorder %s67, %s68
      %p82 = scmp.eq.s32.totalorder %s30, 7
      %p83 = por %p81, %p82
      %p85 = scmp.ne.s32.totalorder %s68, %s84
      %p86 = scmp.eq.s32.totalorder %s30, 0
      %p87 = por %p85, %p86
      %s88 = sld [smem:[#allocation3 + %s24]]
      %s89 = sld [smem:[#allocation3 + %s31]]
      %s90 = ssub.s32 %s88, %s89
      %p91 = scmp.eq.s32.totalorder %s90, 0
      %s93 = sadd.s32 %s92, 1
      %s94 = scalar_select %p91, %s92, %s93
      %p97 = pneg %p91
      %p98 = scmp.eq.s32.totalorder %s24, 7
      %p99 = por %p97, %p98
      %p100 = scmp.ne.s32.totalorder %s92, %s95
      %p101 = scmp.eq.s32.totalorder %s24, 0
      %p102 = por %p100, %p101
      %p103 = scmp.ne.s32.totalorder %s92, %s95
      %p104 = scmp.eq.s32.totalorder %s29, 7
      %p105 = por %p103, %p104
      %p106 = scmp.ne.s32.totalorder %s95, %s96
      %p107 = scmp.eq.s32.totalorder %s29, 0
      %p108 = por %p106, %p107
      %p109 = scmp.ne.s32.totalorder %s95, %s96
      %p110 = scmp.eq.s32.totalorder %s30, 7
      %p111 = por %p109, %p110
      %p113 = scmp.ne.s32.totalorder %s96, %s112
      %p114 = scmp.eq.s32.totalorder %s30, 0
      %p115 = por %p113, %p114
      %s117 = sadd.s32 %s116, 1
      %p120 = scmp.eq.s32.totalorder %s24, 7
      %p121 = scmp.ne.s32.totalorder %s116, %s118
      %p122 = scmp.eq.s32.totalorder %s24, 0
      %p123 = por %p121, %p122
      %p124 = scmp.ne.s32.totalorder %s116, %s118
      %p125 = scmp.eq.s32.totalorder %s29, 7
      %p126 = por %p124, %p125
      %p127 = scmp.ne.s32.totalorder %s118, %s119
      %p128 = scmp.eq.s32.totalorder %s29, 0
      %p129 = por %p127, %p128
      %p130 = scmp.ne.s32.totalorder %s118, %s119
      %p131 = scmp.eq.s32.totalorder %s30, 7
      %p132 = por %p130, %p131
      %p134 = scmp.ne.s32.totalorder %s119, %s133
      %p135 = scmp.eq.s32.totalorder %s30, 0
      %p136 = por %p134, %p135
      %s138 = sadd.s32 %s137, 1
      %p141 = scmp.eq.s32.totalorder %s24, 7
      %p142 = scmp.ne.s32.totalorder %s137, %s139
      %p143 = scmp.eq.s32.totalorder %s24, 0
      %p144 = por %p142, %p143
      %p145 = scmp.ne.s32.totalorder %s137, %s139
      %p146 = scmp.eq.s32.totalorder %s29, 7
      %p147 = por %p145, %p146
      %p148 = scmp.ne.s32.totalorder %s139, %s140
      %p149 = scmp.eq.s32.totalorder %s29, 0
      %p150 = por %p148, %p149
      %p151 = scmp.ne.s32.totalorder %s139, %s140
      %p152 = scmp.eq.s32.totalorder %s30, 7
      %p153 = por %p151, %p152
      %p155 = scmp.ne.s32.totalorder %s140, %s154
      %p156 = scmp.eq.s32.totalorder %s30, 0
      %p157 = por %p155, %p156
      %s158 = ssub.s32 %s24, %s31
      %p159 = scmp.eq.s32.totalorder %s158, 0
      %s161 = sadd.s32 %s160, 1
      %s162 = scalar_select %p159, %s160, %s161
      %p165 = pneg %p159
      %p166 = scmp.eq.s32.totalorder %s24, 7
      %p167 = por %p165, %p166
      %p168 = scmp.ne.s32.totalorder %s160, %s163
      %p169 = scmp.eq.s32.totalorder %s24, 0
      %p170 = por %p168, %p169
      %p171 = scmp.ne.s32.totalorder %s160, %s163
      %p172 = scmp.eq.s32.totalorder %s29, 7
      %p173 = por %p171, %p172
      %p174 = scmp.ne.s32.totalorder %s163, %s164
      %p175 = scmp.eq.s32.totalorder %s29, 0
      %p176 = por %p174, %p175
      %p177 = scmp.ne.s32.totalorder %s163, %s164
      %p178 = scmp.eq.s32.totalorder %s30, 7
      %p179 = por %p177, %p178
      %p181 = scmp.ne.s32.totalorder %s164, %s180
      %p182 = scmp.eq.s32.totalorder %s30, 0
      %p183 = por %p181, %p182
      %s185 = sadd.s32 %s184, 1
      %p188 = scmp.eq.s32.totalorder %s24, 7
      %p189 = scmp.ne.s32.totalorder %s184, %s186
      %p190 = scmp.eq.s32.totalorder %s24, 0
      %p191 = por %p189, %p190
      %p192 = scmp.ne.s32.totalorder %s184, %s186
      %p193 = scmp.eq.s32.totalorder %s29, 7
      %p194 = por %p192, %p193
      %p195 = scmp.ne.s32.totalorder %s186, %s187
      %p196 = scmp.eq.s32.totalorder %s29, 0
      %p197 = por %p195, %p196
      %p198 = scmp.ne.s32.totalorder %s186, %s187
      %p199 = scmp.eq.s32.totalorder %s30, 7
      %p200 = por %p198, %p199
      %p202 = scmp.ne.s32.totalorder %s187, %s201
      %p203 = scmp.eq.s32.totalorder %s30, 0
      %p204 = por %p202, %p203
      %p205 = scmp.le.s32.totalorder 1, %s24
      %p206 = scmp.lt.s32.totalorder %s24, 9
      %p207 = pnand %p205, %p206
      %p208 = pneg %p207
      // Predicated region
      $region9: #{tpu_custom_call.1} parent=5 // pred_check
        _
      $region10: #{tpu_custom_call.1} parent=5 // pred_check_branch
        %210 = sbr.rel (%p207) target = $region12
      $region11: #{tpu_custom_call.1} parent=5 // pred_region
        %s211 = ssub.s32 %s24, 1
        // Predicated region
        $region13: #{tpu_custom_call.1} parent=11 // pred_check
          %p212 = pneg %p129
        $region14: #{tpu_custom_call.1} parent=11 // pred_check_branch
          %214 = sbr.rel (%p212) target = $region16
        $region15: #{tpu_custom_call.1} parent=11 // pred_region
          _
        $region16: #{tpu_custom_call.1} parent=11 // pred_fallthru
          _
        // Predicated region
        $region17: #{tpu_custom_call.1} parent=11 // pred_check
          %p215 = pneg %p150
        $region18: #{tpu_custom_call.1} parent=11 // pred_check_branch
          %217 = sbr.rel (%p215) target = $region20
        $region19: #{tpu_custom_call.1} parent=11 // pred_region
          _
        $region20: #{tpu_custom_call.1} parent=11 // pred_fallthru
          _
      $region12: #{tpu_custom_call.1} parent=5 // pred_fallthru
        _
      %p218 = scmp.lt.s32.totalorder %s24, 8
      // Predicated region
      $region21: #{tpu_custom_call.1} parent=5 // pred_check
        %p219 = pneg %p218
      $region22: #{tpu_custom_call.1} parent=5 // pred_check_branch
        %221 = sbr.rel (%p219) target = $region24
      $region23: #{tpu_custom_call.1} parent=5 // pred_region
        // Predicated region
        $region25: #{tpu_custom_call.1} parent=23 // pred_check
          %p222 = pneg %p46
        $region26: #{tpu_custom_call.1} parent=23 // pred_check_branch
          %224 = sbr.rel (%p222) target = $region28
        $region27: #{tpu_custom_call.1} parent=23 // pred_region
          %s225 = sld [smem:[#allocation3 + %s24]]
          %p226 = scmp.lt.s32.totalorder %s225, 15
          %s227 = scalar_select %p226, %s225, 15
          %s228 = smul.addr %s227, 4
          %s229 = scalar_lea.vmem %s1, %s228
          %s230 = sld [smem:[#allocation3 + %s24]]
        $region28: #{tpu_custom_call.1} parent=23 // pred_fallthru
          _
        // Predicated region
        $region29: #{tpu_custom_call.1} parent=23 // pred_check
          %p231 = pneg %p74
        $region30: #{tpu_custom_call.1} parent=23 // pred_check_branch
          %233 = sbr.rel (%p231) target = $region32
        $region31: #{tpu_custom_call.1} parent=23 // pred_region
          %s234 = sld [smem:[#allocation3 + %s24]]
          %p235 = scmp.lt.s32.totalorder %s234, 15
          %s236 = scalar_select %p235, %s234, 15
          %s237 = scalar_lea.vmem %s2, %s236
          %s238 = sld [smem:[#allocation3 + %s24]]
        $region32: #{tpu_custom_call.1} parent=23 // pred_fallthru
          _
        // Predicated region
        $region33: #{tpu_custom_call.1} parent=23 // pred_check
          %p239 = pneg %p102
        $region34: #{tpu_custom_call.1} parent=23 // pred_check_branch
          %241 = sbr.rel (%p239) target = $region36
        $region35: #{tpu_custom_call.1} parent=23 // pred_region
          %s242 = sld [smem:[#allocation3 + %s24]]
          %p243 = scmp.lt.s32.totalorder %s242, 15
          %s244 = scalar_select %p243, %s242, 15
          %s245 = scalar_lea.vmem %s3, %s244
          %s246 = sld [smem:[#allocation3 + %s24]]
        $region36: #{tpu_custom_call.1} parent=23 // pred_fallthru
          _
      $region24: #{tpu_custom_call.1} parent=5 // pred_fallthru
        _
      %p247 = scmp.le.s32.totalorder 1, %s24
      %p248 = scmp.lt.s32.totalorder %s24, 9
      %p249 = pnand %p247, %p248
      %p250 = pneg %p249
      // Predicated region
      $region37: #{tpu_custom_call.1} parent=5 // pred_check
        _
      $region38: #{tpu_custom_call.1} parent=5 // pred_check_branch
        %252 = sbr.rel (%p249) target = $region40
      $region39: #{tpu_custom_call.1} parent=5 // pred_region
        %s253 = ssub.s32 %s24, 1
        %s254 = sld [smem:[#allocation3 + %s29]]
        %p255 = scmp.lt.s32.totalorder %s254, 15
        %s256 = scalar_select %p255, %s254, 15
        %s257 = smul.addr %s256, 4
        %s258 = scalar_lea.vmem %s1, %s257
        %p259 = pneg %p52
        %p260 = pneg %p49
        %s261 = sld [smem:[#allocation3 + %s29]]
        %p262 = scmp.lt.s32.totalorder %s261, 15
        %s263 = scalar_select %p262, %s261, 15
        %s264 = scalar_lea.vmem %s2, %s263
        %p265 = pneg %p80
        %p266 = pneg %p77
        %s267 = sld [smem:[#allocation3 + %s29]]
        %p268 = scmp.lt.s32.totalorder %s267, 15
        %s269 = scalar_select %p268, %s267, 15
        %s270 = scalar_lea.vmem %s3, %s269
        %p271 = pneg %p108
        %p272 = pneg %p105
        %p273 = pneg %p129
        %p274 = pneg %p126
        %p275 = pneg %p150
        %p276 = pneg %p147
        %p277 = pneg %p176
        %p278 = pneg %p173
        %s279 = sand.u32 %s163, 1
        %s280 = scalar_lea.sflag [#allocation5], %s279
        %s281 = sand.u32 %s163, 1
        %s282 = scalar_lea.vmem [#allocation4], %s281
        %p283 = pneg %p197
        %p284 = pneg %p194
        %s285 = sld [smem:[#allocation3 + %s29]]
        %p286 = scmp.lt.s32.totalorder %s285, 15
        %s287 = scalar_select %p286, %s285, 15
        %s288 = smul.addr %s287, 4
        %s289 = scalar_lea.vmem %s1, %s288
        %s290 = sld [smem:[#allocation3 + %s29]]
        %s291 = sld [smem:[#allocation3 + %s29]]
        %p292 = scmp.lt.s32.totalorder %s291, 15
        %s293 = scalar_select %p292, %s291, 15
        %s294 = scalar_lea.vmem %s2, %s293
        %s295 = sld [smem:[#allocation3 + %s29]]
        %s296 = sld [smem:[#allocation3 + %s29]]
        %p297 = scmp.lt.s32.totalorder %s296, 15
        %s298 = scalar_select %p297, %s296, 15
        %s299 = scalar_lea.vmem %s3, %s298
        %s300 = sld [smem:[#allocation3 + %s29]]
        %v302 = vld [vmem:[%s289] sm:$0xf]
        %v304 = vlaneseq
        %v305 = vshrl.u32 %v304, 7
        %v306 = vsub.s32 0, %v305
        %v307 = vrot.slane %v302, %v306
        %v308 = vlaneseq
        %v309 = vshrl.u32 %v308, 7
        %v310 = vsub.s32 1, %v309
        %v311 = vrot.slane %v302, %v310
        %v312 = vlaneseq
        %v313 = vshrl.u32 %v312, 7
        %v314 = vsub.s32 2, %v313
        %v315 = vrot.slane %v302, %v314
        %v316 = vlaneseq
        %v317 = vshrl.u32 %v316, 7
        %v318 = vsub.s32 3, %v317
        %v319 = vrot.slane %v302, %v318
        %v324 = vpack.c.bf16 %v307, %v307
        %v325 = vpack.c.bf16 %v311, %v311
        %v326 = vpack.c.bf16 %v315, %v315
        %v327 = vpack.c.bf16 %v319, %v319
        %v328 = vld [vmem:[%s4] sm:$0xf]
        %v329 = vld [vmem:[%s4 + $0x4] sm:$0xf]
        %v330 = vld [vmem:[%s4 + $0x8] sm:$0xf]
        %v331 = vld [vmem:[%s4 + $0xc] sm:$0xf]
        %v332 = vld [vmem:[%s4 + $0x10] sm:$0xf]
        %v333 = vld [vmem:[%s4 + $0x14] sm:$0xf]
        %v334 = vld [vmem:[%s4 + $0x18] sm:$0xf]
        %v335 = vld [vmem:[%s4 + $0x1c] sm:$0xf]
        %v336 = vld [vmem:[%s4 + $0x20] sm:$0xf]
        %v337 = vld [vmem:[%s4 + $0x24] sm:$0xf]
        %v338 = vld [vmem:[%s4 + $0x28] sm:$0xf]
        %v339 = vld [vmem:[%s4 + $0x2c] sm:$0xf]
        %v340 = vld [vmem:[%s4 + $0x30] sm:$0xf]
        %v341 = vld [vmem:[%s4 + $0x34] sm:$0xf]
        %v342 = vld [vmem:[%s4 + $0x38] sm:$0xf]
        %v343 = vld [vmem:[%s4 + $0x3c] sm:$0xf]
        %v344 = vld [vmem:[%s4 + $0x40] sm:$0xf]
        %v345 = vld [vmem:[%s4 + $0x44] sm:$0xf]
        %v346 = vld [vmem:[%s4 + $0x48] sm:$0xf]
        %v347 = vld [vmem:[%s4 + $0x4c] sm:$0xf]
        %v348 = vld [vmem:[%s4 + $0x50] sm:$0xf]
        %v349 = vld [vmem:[%s4 + $0x54] sm:$0xf]
        %v350 = vld [vmem:[%s4 + $0x58] sm:$0xf]
        %v351 = vld [vmem:[%s4 + $0x5c] sm:$0xf]
        %v352 = vld [vmem:[%s4 + $0x60] sm:$0xf]
        %v353 = vld [vmem:[%s4 + $0x64] sm:$0xf]
        %v354 = vld [vmem:[%s4 + $0x68] sm:$0xf]
        %v355 = vld [vmem:[%s4 + $0x6c] sm:$0xf]
        %v356 = vld [vmem:[%s4 + $0x70] sm:$0xf]
        %v357 = vld [vmem:[%s4 + $0x74] sm:$0xf]
        %v358 = vld [vmem:[%s4 + $0x78] sm:$0xf]
        %v359 = vld [vmem:[%s4 + $0x7c] sm:$0xf]
        %v360 = vld [vmem:[%s4 + $0x80] sm:$0xf]
        %v361 = vld [vmem:[%s4 + $0x84] sm:$0xf]
        %v362 = vld [vmem:[%s4 + $0x88] sm:$0xf]
        %v363 = vld [vmem:[%s4 + $0x8c] sm:$0xf]
        %v364 = vld [vmem:[%s4 + $0x90] sm:$0xf]
        %v365 = vld [vmem:[%s4 + $0x94] sm:$0xf]
        %v366 = vld [vmem:[%s4 + $0x98] sm:$0xf]
        %v367 = vld [vmem:[%s4 + $0x9c] sm:$0xf]
        %v368 = vld [vmem:[%s4 + $0xa0] sm:$0xf]
        %v369 = vld [vmem:[%s4 + $0xa4] sm:$0xf]
        %v370 = vld [vmem:[%s4 + $0xa8] sm:$0xf]
        %v371 = vld [vmem:[%s4 + $0xac] sm:$0xf]
        %v372 = vld [vmem:[%s4 + $0xb0] sm:$0xf]
        %v373 = vld [vmem:[%s4 + $0xb4] sm:$0xf]
        %v374 = vld [vmem:[%s4 + $0xb8] sm:$0xf]
        %v375 = vld [vmem:[%s4 + $0xbc] sm:$0xf]
        %v376 = vld [vmem:[%s4 + $0xc0] sm:$0xf]
        %v377 = vld [vmem:[%s4 + $0xc4] sm:$0xf]
        %v378 = vld [vmem:[%s4 + $0xc8] sm:$0xf]
        %v379 = vld [vmem:[%s4 + $0xcc] sm:$0xf]
        %v380 = vld [vmem:[%s4 + $0xd0] sm:$0xf]
        %v381 = vld [vmem:[%s4 + $0xd4] sm:$0xf]
        %v382 = vld [vmem:[%s4 + $0xd8] sm:$0xf]
        %v383 = vld [vmem:[%s4 + $0xdc] sm:$0xf]
        %v384 = vld [vmem:[%s4 + $0xe0] sm:$0xf]
        %v385 = vld [vmem:[%s4 + $0xe4] sm:$0xf]
        %v386 = vld [vmem:[%s4 + $0xe8] sm:$0xf]
        %v387 = vld [vmem:[%s4 + $0xec] sm:$0xf]
        %v388 = vld [vmem:[%s4 + $0xf0] sm:$0xf]
        %v389 = vld [vmem:[%s4 + $0xf4] sm:$0xf]
        %v390 = vld [vmem:[%s4 + $0xf8] sm:$0xf]
        %v391 = vld [vmem:[%s4 + $0xfc] sm:$0xf]
        %v392 = vld [vmem:[%s294] sm:$0x1]
        %v393 = vld [vmem:[%s5] sm:$0x1]
        %395 = vset.pattern.permute.xlu0 0
        %396 = vperm.xlu0 %395, %v392
        %v397 = vpop.permute.xlu0 %396
        %v399 = vlaneseq
        %v400 = vshrl.u32 %v399, 7
        %v401 = vsub.s32 0, %v400
        %v402 = vrot.slane %v397, %v401
        %v403 = vmul.f32 %v402, %v393
        %v468 = vunpack.c.l.b16 %v328
        %v469 = vunpack.c.l.b16 %v329
        %v470 = vunpack.c.l.b16 %v330
        %v471 = vunpack.c.l.b16 %v331
        %v472 = vunpack.c.l.b16 %v332
        %v473 = vunpack.c.l.b16 %v333
        %v474 = vunpack.c.l.b16 %v334
        %v475 = vunpack.c.l.b16 %v335
        %v476 = vunpack.c.l.b16 %v336
        %v477 = vunpack.c.l.b16 %v337
        %v478 = vunpack.c.l.b16 %v338
        %v479 = vunpack.c.l.b16 %v339
        %v480 = vunpack.c.l.b16 %v340
        %v481 = vunpack.c.l.b16 %v341
        %v482 = vunpack.c.l.b16 %v342
        %v483 = vunpack.c.l.b16 %v343
        %v484 = vunpack.c.l.b16 %v344
        %v485 = vunpack.c.l.b16 %v345
        %v486 = vunpack.c.l.b16 %v346
        %v487 = vunpack.c.l.b16 %v347
        %v488 = vunpack.c.l.b16 %v348
        %v489 = vunpack.c.l.b16 %v349
        %v490 = vunpack.c.l.b16 %v350
        %v491 = vunpack.c.l.b16 %v351
        %v492 = vunpack.c.l.b16 %v352
        %v493 = vunpack.c.l.b16 %v353
        %v494 = vunpack.c.l.b16 %v354
        %v495 = vunpack.c.l.b16 %v355
        %v496 = vunpack.c.l.b16 %v356
        %v497 = vunpack.c.l.b16 %v357
        %v498 = vunpack.c.l.b16 %v358
        %v499 = vunpack.c.l.b16 %v359
        %v500 = vunpack.c.l.b16 %v360
        %v501 = vunpack.c.l.b16 %v361
        %v502 = vunpack.c.l.b16 %v362
        %v503 = vunpack.c.l.b16 %v363
        %v504 = vunpack.c.l.b16 %v364
        %v505 = vunpack.c.l.b16 %v365
        %v506 = vunpack.c.l.b16 %v366
        %v507 = vunpack.c.l.b16 %v367
        %v508 = vunpack.c.l.b16 %v368
        %v509 = vunpack.c.l.b16 %v369
        %v510 = vunpack.c.l.b16 %v370
        %v511 = vunpack.c.l.b16 %v371
        %v512 = vunpack.c.l.b16 %v372
        %v513 = vunpack.c.l.b16 %v373
        %v514 = vunpack.c.l.b16 %v374
        %v515 = vunpack.c.l.b16 %v375
        %v516 = vunpack.c.l.b16 %v376
        %v517 = vunpack.c.l.b16 %v377
        %v518 = vunpack.c.l.b16 %v378
        %v519 = vunpack.c.l.b16 %v379
        %v520 = vunpack.c.l.b16 %v380
        %v521 = vunpack.c.l.b16 %v381
        %v522 = vunpack.c.l.b16 %v382
        %v523 = vunpack.c.l.b16 %v383
        %v524 = vunpack.c.l.b16 %v384
        %v525 = vunpack.c.l.b16 %v385
        %v526 = vunpack.c.l.b16 %v386
        %v527 = vunpack.c.l.b16 %v387
        %v528 = vunpack.c.l.b16 %v388
        %v529 = vunpack.c.l.b16 %v389
        %v530 = vunpack.c.l.b16 %v390
        %v531 = vunpack.c.l.b16 %v391
        %v532 = vpack.c.b16 %v469, %v468
        %v533 = vpack.c.b16 %v471, %v470
        %v534 = vpack.c.b16 %v473, %v472
        %v535 = vpack.c.b16 %v475, %v474
        %v536 = vpack.c.b16 %v477, %v476
        %v537 = vpack.c.b16 %v479, %v478
        %v538 = vpack.c.b16 %v481, %v480
        %v539 = vpack.c.b16 %v483, %v482
        %v540 = vpack.c.b16 %v485, %v484
        %v541 = vpack.c.b16 %v487, %v486
        %v542 = vpack.c.b16 %v489, %v488
        %v543 = vpack.c.b16 %v491, %v490
        %v544 = vpack.c.b16 %v493, %v492
        %v545 = vpack.c.b16 %v495, %v494
        %v546 = vpack.c.b16 %v497, %v496
        %v547 = vpack.c.b16 %v499, %v498
        %v548 = vpack.c.b16 %v501, %v500
        %v549 = vpack.c.b16 %v503, %v502
        %v550 = vpack.c.b16 %v505, %v504
        %v551 = vpack.c.b16 %v507, %v506
        %v552 = vpack.c.b16 %v509, %v508
        %v553 = vpack.c.b16 %v511, %v510
        %v554 = vpack.c.b16 %v513, %v512
        %v555 = vpack.c.b16 %v515, %v514
        %v556 = vpack.c.b16 %v517, %v516
        %v557 = vpack.c.b16 %v519, %v518
        %v558 = vpack.c.b16 %v521, %v520
        %v559 = vpack.c.b16 %v523, %v522
        %v560 = vpack.c.b16 %v525, %v524
        %v561 = vpack.c.b16 %v527, %v526
        %v562 = vpack.c.b16 %v529, %v528
        %v563 = vpack.c.b16 %v531, %v530
        %596 = vmatprep.subr.bf16.mxu0 0
        %597 = vmatpush1.bf16.msra.mxu0 %v539
        %598 = vmatprep.subr.bf16.mxu0 0
        %599 = vmatpush1.bf16.msra.mxu0 %v538
        %600 = vmatprep.subr.bf16.mxu0 0
        %601 = vmatpush1.bf16.msra.mxu0 %v537
        %602 = vmatprep.subr.bf16.mxu0 0
        %603 = vmatpush1.bf16.msra.mxu0 %v536
        %604 = vmatprep.subr.bf16.mxu0 0
        %605 = vmatpush1.bf16.msra.mxu0 %v535
        %606 = vmatprep.subr.bf16.mxu0 0
        %607 = vmatpush1.bf16.msra.mxu0 %v534
        %608 = vmatprep.subr.bf16.mxu0 0
        %609 = vmatpush1.bf16.msra.mxu0 %v533
        %610 = vmatprep.subr.bf16.mxu0 0
        %611 = vmatpush1.bf16.msra.mxu0 %v532
        %612 = vmatprep.subr.bf16.mxu0 0
        %613 = vmatpush2.bf16.msra.mxu0 %v547
        %614 = vmatprep.subr.bf16.mxu0 0
        %615 = vmatpush2.bf16.msra.mxu0 %v546
        %616 = vmatprep.subr.bf16.mxu0 0
        %617 = vmatpush2.bf16.msra.mxu0 %v545
        %618 = vmatprep.subr.bf16.mxu0 0
        %619 = vmatpush2.bf16.msra.mxu0 %v544
        %620 = vmatprep.subr.bf16.mxu0 0
        %621 = vmatpush2.bf16.msra.mxu0 %v543
        %622 = vmatprep.subr.bf16.mxu0 0
        %623 = vmatpush2.bf16.msra.mxu0 %v542
        %624 = vmatprep.subr.bf16.mxu0 0
        %625 = vmatpush2.bf16.msra.mxu0 %v541
        %626 = vmatprep.subr.bf16.mxu0 0
        %627 = vmatpush2.bf16.msra.mxu0 %v540
        %628 = vmatprep.mubr.bf16.mxu0 %v325
        %629 = vmatmul.mubr.bf16.gmra.mxu0 %v324
        %v630 = vpop.f32.mrf.mxu0
        %v631 = vadd.f32 %v403, %v630
        %v632 = vpop.f32.mrf.mxu0
        %v633 = vpop.f32.mrf.mxu0
        %v634 = vpop.f32.mrf.mxu0
        %635 = vdwg.mxu0
        %636 = vmatprep.subr.bf16.mxu0 0
        %637 = vmatpush1.bf16.msra.mxu0 %v555
        %638 = vmatprep.subr.bf16.mxu0 0
        %639 = vmatpush1.bf16.msra.mxu0 %v554
        %640 = vmatprep.subr.bf16.mxu0 0
        %641 = vmatpush1.bf16.msra.mxu0 %v553
        %642 = vmatprep.subr.bf16.mxu0 0
        %643 = vmatpush1.bf16.msra.mxu0 %v552
        %644 = vmatprep.subr.bf16.mxu0 0
        %645 = vmatpush1.bf16.msra.mxu0 %v551
        %646 = vmatprep.subr.bf16.mxu0 0
        %647 = vmatpush1.bf16.msra.mxu0 %v550
        %648 = vmatprep.subr.bf16.mxu0 0
        %649 = vmatpush1.bf16.msra.mxu0 %v549
        %650 = vmatprep.subr.bf16.mxu0 0
        %651 = vmatpush1.bf16.msra.mxu0 %v548
        %652 = vmatprep.subr.bf16.mxu0 0
        %653 = vmatpush2.bf16.msra.mxu0 %v563
        %654 = vmatprep.subr.bf16.mxu0 0
        %655 = vmatpush2.bf16.msra.mxu0 %v562
        %656 = vmatprep.subr.bf16.mxu0 0
        %657 = vmatpush2.bf16.msra.mxu0 %v561
        %658 = vmatprep.subr.bf16.mxu0 0
        %659 = vmatpush2.bf16.msra.mxu0 %v560
        %660 = vmatprep.subr.bf16.mxu0 0
        %661 = vmatpush2.bf16.msra.mxu0 %v559
        %662 = vmatprep.subr.bf16.mxu0 0
        %663 = vmatpush2.bf16.msra.mxu0 %v558
        %664 = vmatprep.subr.bf16.mxu0 0
        %665 = vmatpush2.bf16.msra.mxu0 %v557
        %666 = vmatprep.subr.bf16.mxu0 0
        %667 = vmatpush2.bf16.msra.mxu0 %v556
        %668 = vmatprep.mubr.bf16.mxu0 %v327
        %669 = vmatmul.mubr.bf16.gmra.mxu0 %v326
        %v670 = vpop.f32.mrf.mxu0
        %v671 = vadd.f32 %v631, %v670
        %v672 = vpop.f32.mrf.mxu0
        %v673 = vpop.f32.mrf.mxu0
        %v674 = vpop.f32.mrf.mxu0
        %675 = vdwg.mxu0
        %v676 = vld [vmem:[%s299] sm:$0x1]
        %v677 = vadd.f32 %v671, %v676
        %vm678 = vcmask 253952
        %v679 = vsel %vm678, %v677, -inf
        %680 = vmax.xlane.f32.xlu0 %v679
        %v681 = vpop.xlane.xlu0 %680
        %v682 = vsub.f32 %v677, %v681
        %v683 = vmul.f32 %v682, 1.442695
        %v684 = vpow.pop %v683
        %v685 = vsel %vm678, %v684, 0.0
        %686 = vadd.xlane.f32.xlu0 %v685
        %v687 = vpop.xlane.xlu0 %686
        %v688 = vrcp.pop %v687
        %v689 = vmul.f32 %v684, %v688
        %690 = vst.msk [vmem:[%s282] sm:$0x1] %vm678, %v689
        %v691 = vmul.f32 %v671, %v671
        %v692 = vsel %vm678, %v691, 0.0
        %693 = vadd.xlane.f32.xlu0 %v692
        %v694 = vpop.xlane.xlu0 %693
        %v695 = vrot.slane %v694, 4
        %v696 = vadd.f32 %v694, %v695
        %v697 = vrot.slane %v696, 2
        %v698 = vadd.f32 %v696, %v697
        %v699 = vrot.slane %v698, 1
        %v700 = vadd.f32 %v698, %v699
        %s701 = vtos %v700
        %p702 = scmp.eq.s32.totalorder %s29, 0
        // Predicated region
        $region41: #{tpu_custom_call.1} parent=39 // pred_check
          %p703 = pneg %p702
        $region42: #{tpu_custom_call.1} parent=39 // pred_check_branch
          %705 = sbr.rel (%p703) target = $region44
        $region43: #{tpu_custom_call.1} parent=39 // pred_region
          %s706 = scalar_lea.smem [#allocation7], 0
          %707 = sst [smem:[%s706]] %s701
        $region44: #{tpu_custom_call.1} parent=39 // pred_fallthru
          _
        %p708 = scmp.gt.s32.totalorder %s29, 0
        // Predicated region
        $region45: #{tpu_custom_call.1} parent=39 // pred_check
          %p709 = pneg %p708
        $region46: #{tpu_custom_call.1} parent=39 // pred_check_branch
          %711 = sbr.rel (%p709) target = $region48
        $region47: #{tpu_custom_call.1} parent=39 // pred_region
          %s712 = sld [smem:[#allocation7]]
          %s713 = sadd.f32 %s712, %s701
          %s714 = scalar_lea.smem [#allocation7], 0
          %715 = sst [smem:[%s714]] %s713
        $region48: #{tpu_custom_call.1} parent=39 // pred_fallthru
          _
        %s716 = sand.u32 %s163, 1
        %s717 = scalar_lea.sflag [#allocation5], %s716
        %s718 = sand.u32 %s163, 1
        %s719 = scalar_lea.vmem [#allocation4], %s718
        // Predicated region
        $region49: #{tpu_custom_call.1} parent=39 // pred_check
          %p720 = pneg %p173
        $region50: #{tpu_custom_call.1} parent=39 // pred_check_branch
          %722 = sbr.rel (%p720) target = $region52
        $region51: #{tpu_custom_call.1} parent=39 // pred_region
          %s724 = ssub.s32 16, 16
          %725 = vsyncadd %s717, %s724
          %s726 = smul.addr %s29, 16
          %s727 = scalar_lea.hbm %s6, %s726
          %s729 = sshll.u32 %s719, 4
          %s730 = int_to_ptr.vmem [resolvable:$true] %s729
          %732 = dma.vmem_to_hbm [thread:$0]  %s730, 16, %s727, %s717
        $region52: #{tpu_custom_call.1} parent=39 // pred_fallthru
          _
        // Predicated region
        $region53: #{tpu_custom_call.1} parent=39 // pred_check
          %p733 = pneg %p194
        $region54: #{tpu_custom_call.1} parent=39 // pred_check_branch
          %735 = sbr.rel (%p733) target = $region56
        $region55: #{tpu_custom_call.1} parent=39 // pred_region
          %s737 = ssub.s32 16, 16
          %738 = vsyncadd [#allocation6], %s737
          %741 = dma.smem_to_hbm [#allocation7], 16, %s7, [#allocation6]
        $region56: #{tpu_custom_call.1} parent=39 // pred_fallthru
          _
        // Predicated region
        $region57: #{tpu_custom_call.1} parent=39 // pred_check
          %p742 = pneg %p194
        $region58: #{tpu_custom_call.1} parent=39 // pred_check_branch
          %744 = sbr.rel (%p742) target = $region60
        $region59: #{tpu_custom_call.1} parent=39 // pred_region
          %745 = dma.done [#allocation6], 16
        $region60: #{tpu_custom_call.1} parent=39 // pred_fallthru
          _
        %746 = sfence
      $region40: #{tpu_custom_call.1} parent=5 // pred_fallthru
        _
      %p747 = scmp.le.s32.totalorder 2, %s24
      // Predicated region
      $region61: #{tpu_custom_call.1} parent=5 // pred_check
        %p748 = pneg %p747
      $region62: #{tpu_custom_call.1} parent=5 // pred_check_branch
        %750 = sbr.rel (%p748) target = $region64
      $region63: #{tpu_custom_call.1} parent=5 // pred_region
        %s751 = ssub.s32 %s24, 2
        // Predicated region
        $region65: #{tpu_custom_call.1} parent=63 // pred_check
          %p752 = pneg %p179
        $region66: #{tpu_custom_call.1} parent=63 // pred_check_branch
          %754 = sbr.rel (%p752) target = $region68
        $region67: #{tpu_custom_call.1} parent=63 // pred_region
          %s755 = sand.u32 %s164, 1
          %s756 = scalar_lea.sflag [#allocation5], %s755
          %s757 = sand.u32 %s164, 1
          %s758 = scalar_lea.vmem [#allocation4], %s757
          %759 = dma.done %s756, 16
        $region68: #{tpu_custom_call.1} parent=63 // pred_fallthru
          _
      $region64: #{tpu_custom_call.1} parent=5 // pred_fallthru
        _
    $region6: #{tpu_custom_call.1} parent=1 // loop_footer
      %s28 = sadd.s32 1, %s24
    $region7: #{tpu_custom_call.1} parent=1 // loop_footer_branch
      %23 = sbr.rel target = $region3
    $region8: #{tpu_custom_call.1} parent=1 // loop_exit
      _
    %760 = vsyncpa [#allocation5], 1
    %s761 = scalar_lea.sflag [#allocation5], 1
    %762 = vsyncpa %s761, 1
    %763 = vsyncpa [#allocation6], 1
    %s764 = scalar_lea.sflag [#allocation6], 1
    %765 = vsyncpa %s764, 1

</llo_original>
